<compile_context>
chip_gen: v7x
topology: tpu7x:2x2x1
jax: 0.10.0
libtpu: 0.0.40
codegen_flags: <defaults>
</compile_context>

<pallas_src>
import jax
import jax.numpy as jnp
from jax.experimental import pallas as pl
from jax.experimental.pallas import tpu as pltpu

SCALE = 1.0 / 116.0
_LANE = 128
_VMEM_LIMIT = 32 * 1024 * 1024     # safe scoped-VMEM cap on v5e/v6e/v7x
_VMEM_BUDGET = 24 * 1024 * 1024    # headroom target when picking tiles
_FUSED_BUDGET = 16 * 1024 * 1024   # threshold for the single-kernel path


def _round_up(x, m):
    return ((x + m - 1) // m) * m


def _pick_tile(n_pad, fits, candidates=(512, 384, 256, 128), min_blocks=1):
    """Largest candidate that divides n_pad, gives >= min_blocks blocks, fits VMEM."""
    for t in candidates:
        if n_pad % t:
            continue
        if n_pad // t < min_blocks:
            continue
        if fits(t):
            return t
    return None


# ---------------------------------------------------------------------------
# Fused kernel (small graphs): out = (A @ (X @ W)) * SCALE, one pallas_call.
# ---------------------------------------------------------------------------
def _fused_kernel(a_ref, x_ref, w_ref, o_ref):
    support = jnp.dot(
        x_ref[...].astype(jnp.bfloat16),
        w_ref[...].astype(jnp.bfloat16),
        preferred_element_type=jnp.float32,
    )
    out = jnp.dot(
        a_ref[...].astype(jnp.bfloat16),
        support.astype(jnp.bfloat16),
        preferred_element_type=jnp.float32,
    )
    o_ref[...] = (out * SCALE).astype(o_ref.dtype)


# ---------------------------------------------------------------------------
# Pass 1: support = X @ W   (row-tiled over X, W resident)
# ---------------------------------------------------------------------------
def _support_kernel(x_ref, w_ref, s_ref):
    s_ref[...] = jnp.dot(
        x_ref[...], w_ref[...], preferred_element_type=jnp.float32
    ).astype(s_ref.dtype)


# ---------------------------------------------------------------------------
# Pass 2 (main): out = (A @ support) * SCALE with support fully VMEM-resident.
# One dot per A row panel; no K grid axis, no accumulator scratch.
# ---------------------------------------------------------------------------
def _aggregate_resident_kernel(a_ref, s_ref, o_ref):
    acc = jnp.dot(
        a_ref[...].astype(jnp.bfloat16),   # in-kernel cast (free under DMA/MXU)
        s_ref[...],
        preferred_element_type=jnp.float32,
    )
    o_ref[...] = (acc * SCALE).astype(o_ref.dtype)


# ---------------------------------------------------------------------------
# Pass 2 (fallback, very large graphs): K-tiled, accumulate directly into the
# resident f32 output block (output index constant across k -> no scratch).
# ---------------------------------------------------------------------------
def _aggregate_tiled_kernel(a_ref, s_ref, o_ref):
    k = pl.program_id(1)

    @pl.when(k == 0)
    def _():
        o_ref[...] = jnp.zeros_like(o_ref)

    o_ref[...] += jnp.dot(
        a_ref[...].astype(jnp.bfloat16),
        s_ref[...],
        preferred_element_type=jnp.float32,
    )

    @pl.when(k == pl.num_programs(1) - 1)
    def _():
        o_ref[...] = o_ref[...] * SCALE


@jax.jit
def graph_convolution_layer(adjacency_matrix, input_features, weight):
    """Pallas implementation of GraphConvolutionLayer.forward."""
    n, f_in = input_features.shape
    assert adjacency_matrix.shape == (n, n)
    assert weight.shape[0] == f_in
    f_out = weight.shape[1]
    out_dtype = input_features.dtype

    # Pad only to lane granularity (128), never to the tile size.
    n_pad = _round_up(n, _LANE)
    f_in_pad = _round_up(f_in, _LANE)
    f_out_pad = _round_up(f_out, _LANE)

    # ---- Fused single-kernel path for small graphs -------------------------
    fused_bytes = (
        2 * n_pad * n_pad * 4          # A (f32, pipeline-buffered)
        + 2 * n_pad * f_in_pad * 4     # X
        + 2 * f_in_pad * f_out_pad * 4  # W
        + n_pad * f_out_pad * 4        # support temporary
        + 2 * n_pad * f_out_pad * 4    # out
    )
    if fused_bytes <= _FUSED_BUDGET:
        a_p = jnp.pad(adjacency_matrix, ((0, n_pad - n), (0, n_pad - n)))
        x_p = jnp.pad(input_features, ((0, n_pad - n), (0, f_in_pad - f_in)))
        w_p = jnp.pad(weight, ((0, f_in_pad - f_in), (0, f_out_pad - f_out)))
        out_padded = pl.pallas_call(
            _fused_kernel,
            out_shape=jax.ShapeDtypeStruct((n_pad, f_out_pad), out_dtype),
            compiler_params=pltpu.CompilerParams(vmem_limit_bytes=_VMEM_LIMIT),
        )(a_p, x_p, w_p)
        return out_padded[:n, :f_out]

    # ---- Two-pass path ------------------------------------------------------
    # X / W are tiny relative to A: fuse pad + cast to bf16 on the host.
    x_bf = jnp.pad(
        input_features, ((0, n_pad - n), (0, f_in_pad - f_in))
    ).astype(jnp.bfloat16)
    w_bf = jnp.pad(
        weight, ((0, f_in_pad - f_in), (0, f_out_pad - f_out))
    ).astype(jnp.bfloat16)

    # A is the dominant HBM stream.  No padding needed -> pass raw f32 and
    # cast in-kernel (avoids a full host cast pass over N^2).  Padding needed
    # -> fuse pad + cast so the kernel streams 2 B/elem.
    if n_pad == n:
        a_in = adjacency_matrix
    else:
        a_in = jnp.pad(
            adjacency_matrix, ((0, n_pad - n), (0, n_pad - n))
        ).astype(jnp.bfloat16)
    a_bytes = a_in.dtype.itemsize

    # ---- Pass 1: support = X @ W (computed once) ---------------------------
    def fits1(t):
        ws = (2 * t * f_in_pad * 2            # X row panels (bf16, 2 buffers)
              + 2 * f_in_pad * f_out_pad * 2  # W (resident)
              + 2 * t * f_out_pad * 2)        # support tiles out
        return ws <= _VMEM_BUDGET

    tm1 = _pick_tile(n_pad, fits1) or _LANE
    support = pl.pallas_call(
        _support_kernel,
        out_shape=jax.ShapeDtypeStruct((n_pad, f_out_pad), jnp.bfloat16),
        grid=(n_pad // tm1,),
        in_specs=[
            pl.BlockSpec((tm1, f_in_pad), lambda i: (i, 0)),
            pl.BlockSpec((f_in_pad, f_out_pad), lambda i: (0, 0)),  # resident
        ],
        out_specs=pl.BlockSpec((tm1, f_out_pad), lambda i: (i, 0)),
        compiler_params=pltpu.CompilerParams(
            dimension_semantics=("parallel",),
            vmem_limit_bytes=_VMEM_LIMIT,
        ),
    )(x_bf, w_bf)

    # ---- Pass 2: out = (A @ support) * 1/116 -------------------------------
    # Preferred: support fully VMEM-resident, K axis collapsed.
    def fits2(t):
        ws = (2 * t * n_pad * a_bytes          # A row panels (2 buffers)
              + 2 * n_pad * f_out_pad * 2      # resident support (conservative x2)
              + 2 * t * f_out_pad * 4)         # out tiles
        return ws <= _VMEM_BUDGET

    min_blocks = 2 if n_pad >= 2 * _LANE else 1   # keep both v7x TCs busy
    tm2 = _pick_tile(n_pad, fits2, min_blocks=min_blocks)

    if tm2 is not None:
        out_padded = pl.pallas_call(
            _aggregate_resident_kernel,
            out_shape=jax.ShapeDtypeStruct((n_pad, f_out_pad), out_dtype),
            grid=(n_pad // tm2,),
            in_specs=[
                pl.BlockSpec((tm2, n_pad), lambda i: (i, 0)),
                pl.BlockSpec((n_pad, f_out_pad), lambda i: (0, 0)),  # resident
            ],
            out_specs=pl.BlockSpec((tm2, f_out_pad), lambda i: (i, 0)),
            compiler_params=pltpu.CompilerParams(
                dimension_semantics=("parallel",),
                vmem_limit_bytes=_VMEM_LIMIT,
            ),
        )(a_in, support)
        return out_padded[:n, :f_out]

    # Fallback (very large graphs): K-tiled with the largest K block that
    # fits; accumulate directly into the resident f32 output block.
    tm = 256 if n_pad % 256 == 0 else _LANE

    def fits_k(t):
        ws = (2 * tm * t * a_bytes
              + 2 * t * f_out_pad * 2
              + 2 * tm * f_out_pad * 4)
        return ws <= _VMEM_BUDGET

    tk = _pick_tile(
        n_pad, fits_k, candidates=(4096, 2048, 1024, 512, 384, 256, 128)
    ) or _LANE

    out_padded = pl.pallas_call(
        _aggregate_tiled_kernel,
        out_shape=jax.ShapeDtypeStruct((n_pad, f_out_pad), jnp.float32),
        grid=(n_pad // tm, n_pad // tk),
        in_specs=[
            pl.BlockSpec((tm, tk), lambda i, k: (i, k)),
            pl.BlockSpec((tk, f_out_pad), lambda i, k: (k, 0)),
        ],
        out_specs=pl.BlockSpec((tm, f_out_pad), lambda i, k: (i, 0)),
        compiler_params=pltpu.CompilerParams(
            dimension_semantics=("parallel", "arbitrary"),
            vmem_limit_bytes=_VMEM_LIMIT,
        ),
    )(a_in, support)
    return out_padded[:n, :f_out].astype(out_dtype)


if __name__ == "__main__":
    # Small, deterministic example shapes:
    #   N = 16 graph nodes, F_in = 32 input features, F_out = 32 output features.
    N, F_IN, F_OUT = 16, 32, 32

    key = jax.random.PRNGKey(0)
    k_adj, k_x, k_w = jax.random.split(key, 3)

    adjacency = jax.random.uniform(k_adj, (N, N), dtype=jnp.float32)
    features = jax.random.normal(k_x, (N, F_IN), dtype=jnp.float32)
    # Deterministic "weight" parameter (module receives it in __init__).
    weight = jax.random.normal(k_w, (F_IN, F_OUT), dtype=jnp.float32) * 0.1

    out = graph_convolution_layer(adjacency, features, weight)
    out = jax.block_until_ready(out)

    # Reference check in plain JAX (mirrors the PyTorch forward exactly).
    ref = (adjacency @ (features @ weight)) * (1.0 / 116.0)
    assert out.shape == (N, F_OUT)
    # bf16 MXU inputs (f32 accumulation) -> looser tolerance than pure f32.
    assert jnp.allclose(out, ref, rtol=2e-2, atol=1e-3), float(
        jnp.max(jnp.abs(out - ref))
    )

    print("KERNEL_OK")
</pallas_src>

<mosaic_0001>
module attributes {stable_mosaic.version = 11 : i64} {
  func.func @_fused_kernel(%arg0: memref<128x128xf32, #tpu.memory_space<vmem>>, %arg1: memref<128x128xf32, #tpu.memory_space<vmem>>, %arg2: memref<128x128xf32, #tpu.memory_space<vmem>>, %arg3: memref<128x128xf32, #tpu.memory_space<vmem>>) attributes {dimension_semantics = [], scalar_prefetch = 0 : i64, scratch_operands = 0 : i64, tpu.core_type = #tpu.core_type<tc>} {
    %c0 = arith.constant 0 : index
    %c0_0 = arith.constant 0 : index
    %0 = vector.load %arg1[%c0, %c0_0] : memref<128x128xf32, #tpu.memory_space<vmem>>, vector<128x128xf32>
    %1 = arith.truncf %0 : vector<128x128xf32> to vector<128x128xbf16>
    %c0_1 = arith.constant 0 : index
    %c0_2 = arith.constant 0 : index
    %2 = vector.load %arg2[%c0_1, %c0_2] : memref<128x128xf32, #tpu.memory_space<vmem>>, vector<128x128xf32>
    %3 = arith.truncf %2 : vector<128x128xf32> to vector<128x128xbf16>
    %cst = arith.constant dense<0.000000e+00> : vector<128x128xf32>
    %4 = tpu.matmul %1, %3, %cst {dimension_numbers = #tpu.dot_dimension_numbers<[1], [0], [0], [1], [0, 0, 1, 1], [], []>} : vector<128x128xbf16>, vector<128x128xbf16>, vector<128x128xf32> -> vector<128x128xf32>
    %c0_3 = arith.constant 0 : index
    %c0_4 = arith.constant 0 : index
    %5 = vector.load %arg0[%c0_3, %c0_4] : memref<128x128xf32, #tpu.memory_space<vmem>>, vector<128x128xf32>
    %6 = arith.truncf %5 : vector<128x128xf32> to vector<128x128xbf16>
    %7 = arith.truncf %4 : vector<128x128xf32> to vector<128x128xbf16>
    %cst_5 = arith.constant dense<0.000000e+00> : vector<128x128xf32>
    %8 = tpu.matmul %6, %7, %cst_5 {dimension_numbers = #tpu.dot_dimension_numbers<[1], [0], [0], [1], [0, 0, 1, 1], [], []>} : vector<128x128xbf16>, vector<128x128xbf16>, vector<128x128xf32> -> vector<128x128xf32>
    %cst_6 = arith.constant 8.620690e-03 : f32
    %9 = vector.broadcast %cst_6 : f32 to vector<128x128xf32>
    %10 = arith.mulf %8, %9 : vector<128x128xf32>
    %c0_7 = arith.constant 0 : index
    %c0_8 = arith.constant 0 : index
    %11 = vector.load %arg3[%c0_7, %c0_8] : memref<128x128xf32, #tpu.memory_space<vmem>>, vector<128x128xf32>
    tpu.vector_store %arg3[%c0_7, %c0_8], %10 {strides = array<i32>} : memref<128x128xf32, #tpu.memory_space<vmem>>, vector<128x128xf32>,
    return
  }
}

</mosaic_0001>

<llo_original>
// kernel: graph_convolution_layer.1
$region0: #{graph_convolution_layer.1}
  #allocation0 [shape = 'u32[]', space=smem, size = 0x4, offset = 0x4, fixed_abs, tag = 'smem constant byte address 0x4 - core index']
  #allocation1 [shape = 'u32[144,128]{1,0:T(1,128)}', space=vmem, size = 0x12000, scoped, tag = 'internal scratch']
  %s0 = inlined_call_operand.vmem [shape: f32[128,128], index: 0, kind: input, shape index: {}]
  %s1 = inlined_call_operand.vmem [shape: f32[128,128], index: 1, kind: input, shape index: {}]
  %s2 = inlined_call_operand.vmem [shape: f32[128,128], index: 2, kind: input, shape index: {}]
  %s3 = inlined_call_operand.vmem [shape: f32[128,128], index: 3, kind: output, shape index: {}]
  %s4 = sld [smem:[#allocation0]]
  $region22: #{graph_convolution_layer.1} parent=0
    _
  %s6 = ssub.s32 1, %s4
  %s7 = scalar_select 0, %s6, %s4
  // Predicated region
  $region2: #{graph_convolution_layer.1} parent=0 // pred_check
    _
  $region3: #{graph_convolution_layer.1} parent=0 // pred_check_branch
    %9 = sbr.rel (0) target = $region5
  $region4: #{graph_convolution_layer.1} parent=0 // pred_region
    _
  $region5: #{graph_convolution_layer.1} parent=0 // pred_fallthru
    _
  // Predicated region
  $region6: #{graph_convolution_layer.1} parent=0 // pred_check
    _
  $region7: #{graph_convolution_layer.1} parent=0 // pred_check_branch
    %11 = sbr.rel (0) target = $region9
  $region8: #{graph_convolution_layer.1} parent=0 // pred_region
    _
  $region9: #{graph_convolution_layer.1} parent=0 // pred_fallthru
    _
  // Predicated region
  $region10: #{graph_convolution_layer.1} parent=0 // pred_check
    _
  $region11: #{graph_convolution_layer.1} parent=0 // pred_check_branch
    %13 = sbr.rel (0) target = $region13
  $region12: #{graph_convolution_layer.1} parent=0 // pred_region
    _
  $region13: #{graph_convolution_layer.1} parent=0 // pred_fallthru
    _
  %v15 = vld [vmem:[%s1] sm:$0xff]
  %v16 = vld [vmem:[%s1 + $0x8] sm:$0xff]
  %v17 = vld [vmem:[%s1 + $0x10] sm:$0xff]
  %v18 = vld [vmem:[%s1 + $0x18] sm:$0xff]
  %v19 = vld [vmem:[%s1 + $0x20] sm:$0xff]
  %v20 = vld [vmem:[%s1 + $0x28] sm:$0xff]
  %v21 = vld [vmem:[%s1 + $0x30] sm:$0xff]
  %v22 = vld [vmem:[%s1 + $0x38] sm:$0xff]
  %v23 = vld [vmem:[%s1 + $0x40] sm:$0xff]
  %v24 = vld [vmem:[%s1 + $0x48] sm:$0xff]
  %v25 = vld [vmem:[%s1 + $0x50] sm:$0xff]
  %v26 = vld [vmem:[%s1 + $0x58] sm:$0xff]
  %v27 = vld [vmem:[%s1 + $0x60] sm:$0xff]
  %v28 = vld [vmem:[%s1 + $0x68] sm:$0xff]
  %v29 = vld [vmem:[%s1 + $0x70] sm:$0xff]
  %v30 = vld [vmem:[%s1 + $0x78] sm:$0xff]
  %v31 = vpack.c.bf16 %v16, %v15
  %v32 = vpack.c.bf16 %v18, %v17
  %v33 = vpack.c.bf16 %v20, %v19
  %v34 = vpack.c.bf16 %v22, %v21
  %v35 = vpack.c.bf16 %v24, %v23
  %v36 = vpack.c.bf16 %v26, %v25
  %v37 = vpack.c.bf16 %v28, %v27
  %v38 = vpack.c.bf16 %v30, %v29
  %v39 = vld [vmem:[%s2] sm:$0xff]
  %v40 = vld [vmem:[%s2 + $0x8] sm:$0xff]
  %v41 = vld [vmem:[%s2 + $0x10] sm:$0xff]
  %v42 = vld [vmem:[%s2 + $0x18] sm:$0xff]
  %v43 = vld [vmem:[%s2 + $0x20] sm:$0xff]
  %v44 = vld [vmem:[%s2 + $0x28] sm:$0xff]
  %v45 = vld [vmem:[%s2 + $0x30] sm:$0xff]
  %v46 = vld [vmem:[%s2 + $0x38] sm:$0xff]
  %v47 = vld [vmem:[%s2 + $0x40] sm:$0xff]
  %v48 = vld [vmem:[%s2 + $0x48] sm:$0xff]
  %v49 = vld [vmem:[%s2 + $0x50] sm:$0xff]
  %v50 = vld [vmem:[%s2 + $0x58] sm:$0xff]
  %v51 = vld [vmem:[%s2 + $0x60] sm:$0xff]
  %v52 = vld [vmem:[%s2 + $0x68] sm:$0xff]
  %v53 = vld [vmem:[%s2 + $0x70] sm:$0xff]
  %v54 = vld [vmem:[%s2 + $0x78] sm:$0xff]
  %v55 = vpack.c.bf16 %v40, %v39
  %v56 = vpack.c.bf16 %v42, %v41
  %v57 = vpack.c.bf16 %v44, %v43
  %v58 = vpack.c.bf16 %v46, %v45
  %v59 = vpack.c.bf16 %v48, %v47
  %v60 = vpack.c.bf16 %v50, %v49
  %v61 = vpack.c.bf16 %v52, %v51
  %v62 = vpack.c.bf16 %v54, %v53
  %63 = vmatprep.subr.bf16.mxu0 0
  %64 = vmatpush1.bf16.msra.mxu0 %v55
  %65 = vmatprep.subr.bf16.mxu0 0
  %66 = vmatpush1.bf16.msra.mxu0 %v56
  %67 = vmatprep.subr.bf16.mxu0 0
  %68 = vmatpush1.bf16.msra.mxu0 %v57
  %69 = vmatprep.subr.bf16.mxu0 0
  %70 = vmatpush1.bf16.msra.mxu0 %v58
  %71 = vmatprep.subr.bf16.mxu0 0
  %72 = vmatpush1.bf16.msra.mxu0 %v59
  %73 = vmatprep.subr.bf16.mxu0 0
  %74 = vmatpush1.bf16.msra.mxu0 %v60
  %75 = vmatprep.subr.bf16.mxu0 0
  %76 = vmatpush1.bf16.msra.mxu0 %v61
  %77 = vmatprep.subr.bf16.mxu0 0
  %78 = vmatpush1.bf16.msra.mxu0 %v62
  %79 = vmatprep.subr.bf16.mxu0 0
  %80 = vmatpush1.bf16.msra.mxu0 0
  %81 = vmatprep.subr.bf16.mxu0 0
  %82 = vmatpush1.bf16.msra.mxu0 0
  %83 = vmatprep.subr.bf16.mxu0 0
  %84 = vmatpush1.bf16.msra.mxu0 0
  %85 = vmatprep.subr.bf16.mxu0 0
  %86 = vmatpush1.bf16.msra.mxu0 0
  %87 = vmatprep.subr.bf16.mxu0 0
  %88 = vmatpush1.bf16.msra.mxu0 0
  %89 = vmatprep.subr.bf16.mxu0 0
  %90 = vmatpush1.bf16.msra.mxu0 0
  %91 = vmatprep.subr.bf16.mxu0 0
  %92 = vmatpush1.bf16.msra.mxu0 0
  %93 = vmatprep.subr.bf16.mxu0 0
  %94 = vmatpush1.bf16.msra.mxu0 0
  %95 = vmatprep.mubr.bf16.mxu0 0
  %96 = vmatmul.mubr.bf16.gmra.mrb[0].mxu0 %v31
  %v97 = vpop.f32.mrb[0].mxu0
  %v98 = vadd.f32 0.0, %v97
  %v99 = vpop.f32.mrb[0].mxu0
  %v100 = vpop.f32.mrb[0].mxu0
  %v101 = vadd.f32 0.0, %v100
  %v102 = vpop.f32.mrb[0].mxu0
  %103 = vmatprep.mubr.bf16.mxu0 0
  %104 = vmatmul.mubr.bf16.gmra.mrb[0].mxu0 %v32
  %v105 = vpop.f32.mrb[0].mxu0
  %v106 = vadd.f32 0.0, %v105
  %v107 = vpop.f32.mrb[0].mxu0
  %v108 = vpop.f32.mrb[0].mxu0
  %v109 = vadd.f32 0.0, %v108
  %v110 = vpop.f32.mrb[0].mxu0
  %111 = vmatprep.mubr.bf16.mxu0 0
  %112 = vmatmul.mubr.bf16.gmra.mrb[0].mxu0 %v33
  %v113 = vpop.f32.mrb[0].mxu0
  %v114 = vadd.f32 0.0, %v113
  %v115 = vpop.f32.mrb[0].mxu0
  %v116 = vpop.f32.mrb[0].mxu0
  %v117 = vadd.f32 0.0, %v116
  %v118 = vpop.f32.mrb[0].mxu0
  %119 = vmatprep.mubr.bf16.mxu0 0
  %120 = vmatmul.mubr.bf16.gmra.mrb[0].mxu0 %v34
  %v121 = vpop.f32.mrb[0].mxu0
  %v122 = vadd.f32 0.0, %v121
  %v123 = vpop.f32.mrb[0].mxu0
  %v124 = vpop.f32.mrb[0].mxu0
  %v125 = vadd.f32 0.0, %v124
  %v126 = vpop.f32.mrb[0].mxu0
  %127 = vmatprep.mubr.bf16.mxu0 0
  %128 = vmatmul.mubr.bf16.gmra.mrb[0].mxu0 %v35
  %v129 = vpop.f32.mrb[0].mxu0
  %v130 = vadd.f32 0.0, %v129
  %v131 = vpop.f32.mrb[0].mxu0
  %v132 = vpop.f32.mrb[0].mxu0
  %v133 = vadd.f32 0.0, %v132
  %v134 = vpop.f32.mrb[0].mxu0
  %135 = vmatprep.mubr.bf16.mxu0 0
  %136 = vmatmul.mubr.bf16.gmra.mrb[0].mxu0 %v36
  %v137 = vpop.f32.mrb[0].mxu0
  %v138 = vadd.f32 0.0, %v137
  %v139 = vpop.f32.mrb[0].mxu0
  %v140 = vpop.f32.mrb[0].mxu0
  %v141 = vadd.f32 0.0, %v140
  %v142 = vpop.f32.mrb[0].mxu0
  %143 = vmatprep.mubr.bf16.mxu0 0
  %144 = vmatmul.mubr.bf16.gmra.mrb[0].mxu0 %v37
  %v145 = vpop.f32.mrb[0].mxu0
  %v146 = vadd.f32 0.0, %v145
  %v147 = vpop.f32.mrb[0].mxu0
  %v148 = vpop.f32.mrb[0].mxu0
  %v149 = vadd.f32 0.0, %v148
  %v150 = vpop.f32.mrb[0].mxu0
  %151 = vmatprep.mubr.bf16.mxu0 0
  %152 = vmatmul.mubr.bf16.gmra.mrb[0].mxu0 %v38
  %v153 = vpop.f32.mrb[0].mxu0
  %v154 = vadd.f32 0.0, %v153
  %v155 = vpop.f32.mrb[0].mxu0
  %v156 = vpop.f32.mrb[0].mxu0
  %v157 = vadd.f32 0.0, %v156
  %v158 = vpop.f32.mrb[0].mxu0
  %159 = vdwg.mxu0
  %v160 = vld [vmem:[%s0] sm:$0xff]
  %v161 = vld [vmem:[%s0 + $0x8] sm:$0xff]
  %v162 = vld [vmem:[%s0 + $0x10] sm:$0xff]
  %v163 = vld [vmem:[%s0 + $0x18] sm:$0xff]
  %v164 = vld [vmem:[%s0 + $0x20] sm:$0xff]
  %v165 = vld [vmem:[%s0 + $0x28] sm:$0xff]
  %v166 = vld [vmem:[%s0 + $0x30] sm:$0xff]
  %v167 = vld [vmem:[%s0 + $0x38] sm:$0xff]
  %v168 = vld [vmem:[%s0 + $0x40] sm:$0xff]
  %v169 = vld [vmem:[%s0 + $0x48] sm:$0xff]
  %v170 = vld [vmem:[%s0 + $0x50] sm:$0xff]
  %v171 = vld [vmem:[%s0 + $0x58] sm:$0xff]
  %v172 = vld [vmem:[%s0 + $0x60] sm:$0xff]
  %v173 = vld [vmem:[%s0 + $0x68] sm:$0xff]
  %v174 = vld [vmem:[%s0 + $0x70] sm:$0xff]
  %v175 = vld [vmem:[%s0 + $0x78] sm:$0xff]
  %v176 = vpack.c.bf16 %v161, %v160
  %v177 = vpack.c.bf16 %v163, %v162
  %v178 = vpack.c.bf16 %v165, %v164
  %v179 = vpack.c.bf16 %v167, %v166
  %v180 = vpack.c.bf16 %v169, %v168
  %v181 = vpack.c.bf16 %v171, %v170
  %v182 = vpack.c.bf16 %v173, %v172
  %v183 = vpack.c.bf16 %v175, %v174
  %v184 = vpack.c.bf16 %v101, %v98
  %v185 = vpack.c.bf16 %v109, %v106
  %v186 = vpack.c.bf16 %v117, %v114
  %v187 = vpack.c.bf16 %v125, %v122
  %v188 = vpack.c.bf16 %v133, %v130
  %v189 = vpack.c.bf16 %v141, %v138
  %v190 = vpack.c.bf16 %v149, %v146
  %v191 = vpack.c.bf16 %v157, %v154
  %192 = vmatprep.subr.bf16.mxu0 0
  %193 = vmatpush1.bf16.msra.mxu0 %v184
  %194 = vmatprep.subr.bf16.mxu0 0
  %195 = vmatpush1.bf16.msra.mxu0 %v185
  %196 = vmatprep.subr.bf16.mxu0 0
  %197 = vmatpush1.bf16.msra.mxu0 %v186
  %198 = vmatprep.subr.bf16.mxu0 0
  %199 = vmatpush1.bf16.msra.mxu0 %v187
  %200 = vmatprep.subr.bf16.mxu0 0
  %201 = vmatpush1.bf16.msra.mxu0 %v188
  %202 = vmatprep.subr.bf16.mxu0 0
  %203 = vmatpush1.bf16.msra.mxu0 %v189
  %204 = vmatprep.subr.bf16.mxu0 0
  %205 = vmatpush1.bf16.msra.mxu0 %v190
  %206 = vmatprep.subr.bf16.mxu0 0
  %207 = vmatpush1.bf16.msra.mxu0 %v191
  %208 = vmatprep.subr.bf16.mxu0 0
  %209 = vmatpush1.bf16.msra.mxu0 0
  %210 = vmatprep.subr.bf16.mxu0 0
  %211 = vmatpush1.bf16.msra.mxu0 0
  %212 = vmatprep.subr.bf16.mxu0 0
  %213 = vmatpush1.bf16.msra.mxu0 0
  %214 = vmatprep.subr.bf16.mxu0 0
  %215 = vmatpush1.bf16.msra.mxu0 0
  %216 = vmatprep.subr.bf16.mxu0 0
  %217 = vmatpush1.bf16.msra.mxu0 0
  %218 = vmatprep.subr.bf16.mxu0 0
  %219 = vmatpush1.bf16.msra.mxu0 0
  %220 = vmatprep.subr.bf16.mxu0 0
  %221 = vmatpush1.bf16.msra.mxu0 0
  %222 = vmatprep.subr.bf16.mxu0 0
  %223 = vmatpush1.bf16.msra.mxu0 0
  %224 = vmatprep.mubr.bf16.mxu0 0
  %225 = vmatmul.mubr.bf16.gmra.mrb[0].mxu0 %v176
  %v226 = vpop.f32.mrb[0].mxu0
  %v227 = vadd.f32 0.0, %v226
  %v228 = vpop.f32.mrb[0].mxu0
  %v229 = vpop.f32.mrb[0].mxu0
  %v230 = vadd.f32 0.0, %v229
  %v231 = vpop.f32.mrb[0].mxu0
  %232 = vmatprep.mubr.bf16.mxu0 0
  %233 = vmatmul.mubr.bf16.gmra.mrb[0].mxu0 %v177
  %v234 = vpop.f32.mrb[0].mxu0
  %v235 = vadd.f32 0.0, %v234
  %v236 = vpop.f32.mrb[0].mxu0
  %v237 = vpop.f32.mrb[0].mxu0
  %v238 = vadd.f32 0.0, %v237
  %v239 = vpop.f32.mrb[0].mxu0
  %240 = vmatprep.mubr.bf16.mxu0 0
  %241 = vmatmul.mubr.bf16.gmra.mrb[0].mxu0 %v178
  %v242 = vpop.f32.mrb[0].mxu0
  %v243 = vadd.f32 0.0, %v242
  %v244 = vpop.f32.mrb[0].mxu0
  %v245 = vpop.f32.mrb[0].mxu0
  %v246 = vadd.f32 0.0, %v245
  %v247 = vpop.f32.mrb[0].mxu0
  %248 = vmatprep.mubr.bf16.mxu0 0
  %249 = vmatmul.mubr.bf16.gmra.mrb[0].mxu0 %v179
  %v250 = vpop.f32.mrb[0].mxu0
  %v251 = vadd.f32 0.0, %v250
  %v252 = vpop.f32.mrb[0].mxu0
  %v253 = vpop.f32.mrb[0].mxu0
  %v254 = vadd.f32 0.0, %v253
  %v255 = vpop.f32.mrb[0].mxu0
  %256 = vmatprep.mubr.bf16.mxu0 0
  %257 = vmatmul.mubr.bf16.gmra.mrb[0].mxu0 %v180
  %v258 = vpop.f32.mrb[0].mxu0
  %v259 = vadd.f32 0.0, %v258
  %v260 = vpop.f32.mrb[0].mxu0
  %v261 = vpop.f32.mrb[0].mxu0
  %v262 = vadd.f32 0.0, %v261
  %v263 = vpop.f32.mrb[0].mxu0
  %264 = vmatprep.mubr.bf16.mxu0 0
  %265 = vmatmul.mubr.bf16.gmra.mrb[0].mxu0 %v181
  %v266 = vpop.f32.mrb[0].mxu0
  %v267 = vadd.f32 0.0, %v266
  %v268 = vpop.f32.mrb[0].mxu0
  %v269 = vpop.f32.mrb[0].mxu0
  %v270 = vadd.f32 0.0, %v269
  %v271 = vpop.f32.mrb[0].mxu0
  %272 = vmatprep.mubr.bf16.mxu0 0
  %273 = vmatmul.mubr.bf16.gmra.mrb[0].mxu0 %v182
  %v274 = vpop.f32.mrb[0].mxu0
  %v275 = vadd.f32 0.0, %v274
  %v276 = vpop.f32.mrb[0].mxu0
  %v277 = vpop.f32.mrb[0].mxu0
  %v278 = vadd.f32 0.0, %v277
  %v279 = vpop.f32.mrb[0].mxu0
  %280 = vmatprep.mubr.bf16.mxu0 0
  %281 = vmatmul.mubr.bf16.gmra.mrb[0].mxu0 %v183
  %v282 = vpop.f32.mrb[0].mxu0
  %v283 = vadd.f32 0.0, %v282
  %v284 = vpop.f32.mrb[0].mxu0
  %v285 = vpop.f32.mrb[0].mxu0
  %v286 = vadd.f32 0.0, %v285
  %v287 = vpop.f32.mrb[0].mxu0
  %288 = vdwg.mxu0
  %v289 = vmul.f32 %v227, 0.00862069
  %v290 = vmul.f32 %v230, 0.00862069
  %v291 = vmul.f32 %v235, 0.00862069
  %v292 = vmul.f32 %v238, 0.00862069
  %v293 = vmul.f32 %v243, 0.00862069
  %v294 = vmul.f32 %v246, 0.00862069
  %v295 = vmul.f32 %v251, 0.00862069
  %v296 = vmul.f32 %v254, 0.00862069
  %v297 = vmul.f32 %v259, 0.00862069
  %v298 = vmul.f32 %v262, 0.00862069
  %v299 = vmul.f32 %v267, 0.00862069
  %v300 = vmul.f32 %v270, 0.00862069
  %v301 = vmul.f32 %v275, 0.00862069
  %v302 = vmul.f32 %v278, 0.00862069
  %v303 = vmul.f32 %v283, 0.00862069
  %v304 = vmul.f32 %v286, 0.00862069
  %305 = vst [vmem:[%s3] sm:$0xff] %v289
  %306 = vst [vmem:[%s3 + $0x8] sm:$0xff] %v290
  %307 = vst [vmem:[%s3 + $0x10] sm:$0xff] %v291
  %308 = vst [vmem:[%s3 + $0x18] sm:$0xff] %v292
  %309 = vst [vmem:[%s3 + $0x20] sm:$0xff] %v293
  %310 = vst [vmem:[%s3 + $0x28] sm:$0xff] %v294
  %311 = vst [vmem:[%s3 + $0x30] sm:$0xff] %v295
  %312 = vst [vmem:[%s3 + $0x38] sm:$0xff] %v296
  %313 = vst [vmem:[%s3 + $0x40] sm:$0xff] %v297
  %314 = vst [vmem:[%s3 + $0x48] sm:$0xff] %v298
  %315 = vst [vmem:[%s3 + $0x50] sm:$0xff] %v299
  %316 = vst [vmem:[%s3 + $0x58] sm:$0xff] %v300
  %317 = vst [vmem:[%s3 + $0x60] sm:$0xff] %v301
  %318 = vst [vmem:[%s3 + $0x68] sm:$0xff] %v302
  %319 = vst [vmem:[%s3 + $0x70] sm:$0xff] %v303
  %320 = vst [vmem:[%s3 + $0x78] sm:$0xff] %v304
  // Predicated region
  $region14: #{graph_convolution_layer.1} parent=0 // pred_check
    _
  $region15: #{graph_convolution_layer.1} parent=0 // pred_check_branch
    %322 = sbr.rel (0) target = $region17
  $region16: #{graph_convolution_layer.1} parent=0 // pred_region
    _
  $region17: #{graph_convolution_layer.1} parent=0 // pred_fallthru
    _
  // Predicated region
  $region18: #{graph_convolution_layer.1} parent=0 // pred_check
    _
  $region19: #{graph_convolution_layer.1} parent=0 // pred_check_branch
    %324 = sbr.rel (0) target = $region21
  $region20: #{graph_convolution_layer.1} parent=0 // pred_region
    _
  $region21: #{graph_convolution_layer.1} parent=0 // pred_fallthru
    _

</llo_original>
